<compile_context>
chip_gen: v6e
topology: v6e:2x2x1
jax: 0.10.0
libtpu: 0.0.40
codegen_flags: <defaults>
</compile_context>

<pallas_src>
import jax
import jax.numpy as jnp
from jax.experimental import pallas as pl
from jax.experimental.pallas import tpu as pltpu


def _spatial_dropout_kernel(m_ref, x_ref, o_ref):
    # m_ref: (rows_blk, 1) pre-scaled keep mask (0 or 1/(1-p)) in VMEM
    # x_ref / o_ref: (rows_blk, cols_blk) lane-dense tiles
    o_ref[...] = x_ref[...] * m_ref[...]


def _round_up(x, m):
    return ((x + m - 1) // m) * m


def _tpu_generation_params():
    """Per-generation (target_block_bytes, num_tensorcores); conservative fallback."""
    budget, cores = 3 * 1024 * 1024, 1        # fits the 16 MiB default scoped VMEM
    try:
        kind = jax.devices()[0].device_kind.lower()
        if "v7" in kind:
            budget, cores = 4 * 1024 * 1024, 2     # 64 MiB phys / 32 MiB scoped, 2 TCs
        elif "v6" in kind:
            budget, cores = 6 * 1024 * 1024, 1     # 32 MiB default scoped, 1 TC
        elif "v5e" in kind or "lite" in kind:
            budget, cores = 3 * 1024 * 1024, 1     # 16 MiB default scoped, 1 TC
        elif "v5" in kind or "v4" in kind:
            budget, cores = 3 * 1024 * 1024, 2     # v4 / v5p megacore (2 TCs)
    except Exception:
        pass
    return budget, cores


def _choose_blocks(rows, cols, itemsize, *, target_block_bytes, sublane, min_grid_steps):
    """Pick a lane-dense block that fits double-buffered VMEM comfortably."""
    # Lane (last) dim: full extent if it fits, else a large multiple of 128.
    max_cols = max(128, target_block_bytes // (sublane * itemsize))
    if cols <= max_cols:
        cols_blk = cols                                  # full extent: always legal
    else:
        cols_blk = min((max_cols // 128) * 128, 4096)    # lane-dense tile

    # Sublane dim: as many rows as fit the budget.  The "+128" accounts for the
    # (rows_blk, 1) mask block's lane padding so its VMEM footprint is budgeted.
    max_rows = max(1, target_block_bytes // ((cols_blk + 128) * itemsize))
    if max_rows >= rows:
        rows_blk = rows                                  # full extent: always legal
    else:
        rows_blk = max(sublane, (max_rows // sublane) * sublane)

    # Megacore load: make sure >=2 TensorCores get work on 2-TC chips whenever
    # the tensor is splittable (no-op when min_grid_steps == 1).
    if min_grid_steps > 1:
        steps = pl.cdiv(rows, rows_blk) * pl.cdiv(cols, cols_blk)
        if steps < min_grid_steps:
            if rows >= 2 * sublane:
                rows_blk = _round_up(pl.cdiv(rows, min_grid_steps), sublane)
            elif cols_blk >= 2 * 128:
                cols_blk = max(128, (pl.cdiv(cols_blk, min_grid_steps) // 128) * 128)
    return rows_blk, cols_blk


def spatial_dropout2d(x, drop_prob, key, training=True, donate_x=False):
    """Matches SpatialDropout2d.forward semantics (training-mode path in Pallas).

    Note: `training` and `drop_prob` must be static Python values (they gate
    Python-level branches), mirroring the PyTorch module's attributes.
    """
    if (not training) or drop_prob == 0:
        return x
    if drop_prob >= 1.0:
        # Everything dropped; avoid 0 * (1/(1-p)) = 0 * inf = NaN.
        return jnp.zeros_like(x)

    B, C, H, W = x.shape
    rows, cols = B * C, H * W

    # Per-(batch, channel) Bernoulli(1 - p) keep mask, pre-scaled by 1/(1 - p)
    # so the kernel does a single broadcast multiply.
    keep = jax.random.bernoulli(key, 1.0 - drop_prob, (rows,))
    scale = jnp.asarray(1.0 / (1.0 - drop_prob), x.dtype)
    mask = (keep.astype(x.dtype) * scale).reshape(rows, 1)

    # Small-spatial fallback: last dim < 128 would force masked partial stores
    # and per-step overhead would dominate — let XLA fuse the multiply instead.
    if cols < 128:
        return (x.reshape(rows, cols) * mask).reshape(B, C, H, W)

    x2 = x.reshape(rows, cols)
    itemsize = x.dtype.itemsize
    sublane = 8 * max(1, 4 // itemsize)        # f32: 8, bf16: 16, int8/fp8: 32
    target_bytes, num_cores = _tpu_generation_params()
    rows_blk, cols_blk = _choose_blocks(
        rows, cols, itemsize,
        target_block_bytes=target_bytes, sublane=sublane, min_grid_steps=num_cores)
    grid = (pl.cdiv(rows, rows_blk), pl.cdiv(cols, cols_blk))

    out2 = pl.pallas_call(
        _spatial_dropout_kernel,
        out_shape=jax.ShapeDtypeStruct((rows, cols), x.dtype),
        grid_spec=pl.GridSpec(
            grid=grid,
            in_specs=[
                pl.BlockSpec((rows_blk, 1), lambda i, j: (i, 0)),
                pl.BlockSpec((rows_blk, cols_blk), lambda i, j: (i, j)),
            ],
            out_specs=pl.BlockSpec((rows_blk, cols_blk), lambda i, j: (i, j)),
        ),
        compiler_params=pltpu.CompilerParams(
            dimension_semantics=("parallel", "parallel"),
        ),
        input_output_aliases=({1: 0} if donate_x else {}),
    )(mask, x2)

    return out2.reshape(B, C, H, W)


def _reference(x, drop_prob, key):
    B, C, H, W = x.shape
    keep = jax.random.bernoulli(key, 1.0 - drop_prob, (B * C,))
    scale = jnp.asarray(1.0 / (1.0 - drop_prob), x.dtype)
    m = (keep.astype(x.dtype) * scale).reshape(B, C, 1, 1)
    return x * m


if __name__ == "__main__":
    key = jax.random.PRNGKey(0)
    k_x, k_mask = jax.random.split(key)
    drop_prob = 0.5

    # Small shape consistent with the module (batch=2, channels=4, spatial=16x16).
    B, C, H, W = 2, 4, 16, 16
    x = jax.random.normal(k_x, (B, C, H, W), dtype=jnp.float32)

    out = jax.block_until_ready(spatial_dropout2d(x, drop_prob, k_mask, training=True))
    ref = _reference(x, drop_prob, k_mask)
    assert out.shape == x.shape and out.dtype == x.dtype
    assert jnp.allclose(out, ref, atol=1e-6), "mismatch vs reference (small f32)"

    # Shape that exercises column tiling / partial boundary blocks.
    x2 = jax.random.normal(k_x, (2, 4, 64, 48), dtype=jnp.float32)
    out2 = jax.block_until_ready(spatial_dropout2d(x2, drop_prob, k_mask, training=True))
    assert jnp.allclose(out2, _reference(x2, drop_prob, k_mask), atol=1e-6), \
        "mismatch vs reference (tiled f32)"

    # bf16 path (dtype-aware sublane rounding).
    xb = jax.random.normal(k_x, (2, 8, 32, 32), dtype=jnp.bfloat16)
    outb = jax.block_until_ready(spatial_dropout2d(xb, drop_prob, k_mask, training=True))
    assert jnp.allclose(outb.astype(jnp.float32),
                        _reference(xb, drop_prob, k_mask).astype(jnp.float32),
                        atol=1e-2), "mismatch vs reference (bf16)"

    # Small-spatial fallback (cols < 128 -> fused XLA path, no kernel launch).
    xs = jax.random.normal(k_x, (2, 4, 7, 7), dtype=jnp.float32)
    outs = jax.block_until_ready(spatial_dropout2d(xs, drop_prob, k_mask, training=True))
    assert jnp.allclose(outs, _reference(xs, drop_prob, k_mask), atol=1e-6), \
        "mismatch vs reference (small spatial)"

    # Donated-input variant (aliases x's buffer to the output).
    outd = jax.block_until_ready(
        spatial_dropout2d(x, drop_prob, k_mask, training=True, donate_x=True))
    assert jnp.allclose(outd, ref, atol=1e-6), "mismatch vs reference (donated)"

    # Identity / degenerate paths.
    assert jnp.array_equal(spatial_dropout2d(x, drop_prob, k_mask, training=False), x)
    assert jnp.array_equal(spatial_dropout2d(x, 0.0, k_mask, training=True), x)
    assert jnp.array_equal(spatial_dropout2d(x, 1.0, k_mask, training=True),
                           jnp.zeros_like(x))

    print("KERNEL_OK")
</pallas_src>

<mosaic_0001>
module attributes {stable_mosaic.version = 11 : i64} {
  func.func @_spatial_dropout_kernel(%arg0: i32, %arg1: i32, %arg2: memref<8x1xf32, #tpu.memory_space<vmem>>, %arg3: memref<8x256xf32, #tpu.memory_space<vmem>>, %arg4: memref<8x256xf32, #tpu.memory_space<vmem>>) attributes {dimension_semantics = [#tpu.dimension_semantics<parallel>, #tpu.dimension_semantics<parallel>], iteration_bounds = array<i64: 1, 1>, scalar_prefetch = 0 : i64, scratch_operands = 0 : i64, tpu.core_type = #tpu.core_type<tc>, window_params = [{transform_indices = @transform_0, window_bounds = array<i64: 8, 1>}, {transform_indices = @transform_1, window_bounds = array<i64: 8, 256>}, {transform_indices = @transform_2, window_bounds = array<i64: 8, 256>}]} {
    %c0 = arith.constant 0 : index
    %c0_0 = arith.constant 0 : index
    %0 = vector.load %arg3[%c0, %c0_0] : memref<8x256xf32, #tpu.memory_space<vmem>>, vector<8x256xf32>
    %c0_1 = arith.constant 0 : index
    %c0_2 = arith.constant 0 : index
    %1 = vector.load %arg2[%c0_1, %c0_2] : memref<8x1xf32, #tpu.memory_space<vmem>>, vector<8x1xf32>
    %2 = vector.broadcast %1 : vector<8x1xf32> to vector<8x256xf32>
    %3 = arith.mulf %0, %2 : vector<8x256xf32>
    %c0_3 = arith.constant 0 : index
    %c0_4 = arith.constant 0 : index
    %4 = vector.load %arg4[%c0_3, %c0_4] : memref<8x256xf32, #tpu.memory_space<vmem>>, vector<8x256xf32>
    tpu.vector_store %arg4[%c0_3, %c0_4], %3 {strides = array<i32>} : memref<8x256xf32, #tpu.memory_space<vmem>>, vector<8x256xf32>,
    return
  }
  func.func @transform_0(%arg0: i32, %arg1: i32) -> (i32, i32) {
    %c0_i32 = arith.constant 0 : i32
    %c0_i32_0 = arith.constant 0 : i32
    return %arg0, %c0_i32 : i32, i32
  }
  func.func @transform_1(%arg0: i32, %arg1: i32) -> (i32, i32) {
    %c0_i32 = arith.constant 0 : i32
    return %arg0, %arg1 : i32, i32
  }
  func.func @transform_2(%arg0: i32, %arg1: i32) -> (i32, i32) {
    %c0_i32 = arith.constant 0 : i32
    return %arg0, %arg1 : i32, i32
  }
}

</mosaic_0001>

<llo_original>
// kernel: tpu_custom_call.1
$region0: #{tpu_custom_call.1}
  #allocation0 [shape = 'u32[]', space=smem, size = 0x4, offset = 0x4, fixed_abs, tag = 'smem constant byte address 0x4 - core index']
  #allocation1 [shape = 'u32[144,128]{1,0:T(1,128)}', space=vmem, size = 0x12000, scoped, tag = 'internal scratch']
  %s0 = inlined_call_operand.vmem [shape: f32[8,1], index: 0, kind: input, shape index: {}]
  %s1 = inlined_call_operand.hbm [shape: f32[8,256], index: 1, kind: input, shape index: {}]
  %s2 = inlined_call_operand.hbm [shape: f32[8,256], index: 2, kind: output, shape index: {}]
  %s3 = sld [smem:[#allocation0]]
  $region22: #{tpu_custom_call.1} parent=0
    _
  %s5 = ssub.s32 1, %s3
  %s6 = scalar_select 0, %s5, %s3
  $region1: #{tpu_custom_call.1} parent=0
    #allocation2 [shape = 'u8[8192]{0}', space=vmem, size = 0x2000, scoped, tag = 'input window, operand 1, single buffered']
    #allocation3 [shape = 's32[1]{0}', space=sflag, size = 0x4, scoped, tag = 'scoped memory for tpu_custom_call.1']
    #allocation4 [shape = 's32[1]{0}', space=sflag, size = 0x4, scoped, tag = 'scoped memory for tpu_custom_call.1']
    #allocation5 [shape = 'u8[8192]{0}', space=vmem, size = 0x2000, scoped, tag = 'output window, operand 0, single buffered']
    %7 = vsyncpa [#allocation3], 0
    %8 = vsyncpa [#allocation4], 0
    // Predicated region
    $region2: #{tpu_custom_call.1} parent=1 // pred_check
      _
    $region3: #{tpu_custom_call.1} parent=1 // pred_check_branch
      %10 = sbr.rel (0) target = $region5
    $region4: #{tpu_custom_call.1} parent=1 // pred_region
      _
    $region5: #{tpu_custom_call.1} parent=1 // pred_fallthru
      _
    // Predicated region
    $region6: #{tpu_custom_call.1} parent=1 // pred_check
      _
    $region7: #{tpu_custom_call.1} parent=1 // pred_check_branch
      %12 = sbr.rel (0) target = $region9
    $region8: #{tpu_custom_call.1} parent=1 // pred_region
      %s14 = ssub.s32 256, 256
      %15 = vsyncadd [#allocation3], %s14
      %s17 = sshll.u32 [#allocation2], 4
      %s18 = int_to_ptr.vmem [resolvable:$true] %s17
      %20 = dma.hbm_to_vmem [thread:$0]  %s1, 256, %s18, [#allocation3]
    $region9: #{tpu_custom_call.1} parent=1 // pred_fallthru
      _
    // Predicated region
    $region10: #{tpu_custom_call.1} parent=1 // pred_check
      _
    $region11: #{tpu_custom_call.1} parent=1 // pred_check_branch
      %22 = sbr.rel (0) target = $region13
    $region12: #{tpu_custom_call.1} parent=1 // pred_region
      %23 = dma.done [#allocation3], 256
    $region13: #{tpu_custom_call.1} parent=1 // pred_fallthru
      _
    %v24 = vld [vmem:[#allocation2] sm:$0xff]
    %v25 = vld [vmem:[#allocation2 + $0x8] sm:$0xff]
    %v26 = vld [vmem:[%s0] sm:$0xff]
    %28 = vset.pattern.permute.xlu0 0
    %29 = vperm.xlu0 %28, %v26
    %v30 = vpop.permute.xlu0 %29
    %v32 = vmul.f32 %v24, %v30
    %v33 = vmul.f32 %v25, %v30
    %34 = vst [vmem:[#allocation5] sm:$0xff] %v32
    %35 = vst [vmem:[#allocation5 + $0x8] sm:$0xff] %v33
    // Predicated region
    $region14: #{tpu_custom_call.1} parent=1 // pred_check
      _
    $region15: #{tpu_custom_call.1} parent=1 // pred_check_branch
      %37 = sbr.rel (0) target = $region17
    $region16: #{tpu_custom_call.1} parent=1 // pred_region
      %s39 = ssub.s32 256, 256
      %40 = vsyncadd [#allocation4], %s39
      %s42 = sshll.u32 [#allocation5], 4
      %s43 = int_to_ptr.vmem [resolvable:$true] %s42
      %45 = dma.vmem_to_hbm [thread:$0]  %s43, 256, %s2, [#allocation4]
    $region17: #{tpu_custom_call.1} parent=1 // pred_fallthru
      _
    // Predicated region
    $region18: #{tpu_custom_call.1} parent=1 // pred_check
      _
    $region19: #{tpu_custom_call.1} parent=1 // pred_check_branch
      %47 = sbr.rel (0) target = $region21
    $region20: #{tpu_custom_call.1} parent=1 // pred_region
      %48 = dma.done [#allocation4], 256
    $region21: #{tpu_custom_call.1} parent=1 // pred_fallthru
      _
    %49 = vsyncpa [#allocation3], 1
    %50 = vsyncpa [#allocation4], 1

</llo_original>
